<compile_context>
chip_gen: v6e
topology: v6e:2x2x1
jax: 0.10.0
libtpu: 0.0.40
codegen_flags: <defaults>
</compile_context>

<pallas_src>
import functools
import math

import jax
import jax.numpy as jnp
from jax.experimental import pallas as pl
from jax.experimental.pallas import tpu as pltpu


def _round_up(x, m):
    return ((x + m - 1) // m) * m


def _taylor_kernel(x_ref, w_ref, d0_ref, o_ref, acc_ref, prod_ref, *s_scratch,
                   tin, n_l, w_resident):
    # grid = (Bpad//tm, Opad//tn, d, n_l)
    #   x_ref : (tm, Inpad)        resident batch row-slab (whole padded In)
    #   w_ref : resident  -> (njo, d, Inpad, tn) whole padded weight tensor
    #           streamed  -> (1, 1, tin, tn) slab for (j, k, l)
    #   d0_ref: (1, tn)            bias tile (f32)
    #   o_ref : (tm, tn)           output tile (resident across k, l)
    #   acc/prod[/s] : (tm, tn) f32 VMEM scratch
    k = pl.program_id(2)          # Taylor term index
    l = pl.program_id(3)          # In-reduction chunk index
    n_k = pl.num_programs(2)

    @pl.when(jnp.logical_and(k == 0, l == 0))
    def _init():
        acc_ref[...] = jnp.zeros_like(acc_ref)
        prod_ref[...] = jnp.ones_like(prod_ref)

    # Current In chunk of the resident x slab.
    if n_l == 1:
        xin = x_ref[...]
    else:
        xin = x_ref[:, pl.ds(pl.multiple_of(l * tin, 128), tin)]

    # Current weight slab.
    if w_resident:
        j = pl.program_id(1)
        if n_l == 1:
            wk = w_ref[j, k]                                   # (Inpad, tn)
        else:
            wk = w_ref[j, k, pl.ds(pl.multiple_of(l * tin, 128), tin), :]
    else:
        wk = w_ref[0, 0]                                       # (tin, tn)

    # MXU contraction over this In chunk, f32 accumulation.
    contrib = jnp.dot(xin, wk, preferred_element_type=jnp.float32)

    if n_l == 1:
        # Fully-reduced term: fold straight into cumprod / running sum.
        prod_ref[...] = prod_ref[...] * contrib
        acc_ref[...] = acc_ref[...] + prod_ref[...]
    else:
        s_ref = s_scratch[0]

        @pl.when(l == 0)
        def _first_chunk():
            s_ref[...] = contrib          # write, not zero-fill + accumulate

        @pl.when(l > 0)
        def _next_chunk():
            s_ref[...] = s_ref[...] + contrib

        @pl.when(l == n_l - 1)
        def _fold_term():
            prod_ref[...] = prod_ref[...] * s_ref[...]
            acc_ref[...] = acc_ref[...] + prod_ref[...]

    @pl.when(jnp.logical_and(k == n_k - 1, l == n_l - 1))
    def _finalize():
        o_ref[...] = (acc_ref[...] +
                      d0_ref[...].astype(jnp.float32)).astype(o_ref.dtype)


def prepare_taylor_params(allweight, d0, *, param_dtype=jnp.bfloat16):
    """One-time (init-time) parameter prep.

    Transposes allweight (O, d, In) -> (d, In, O), zero-pads In/O to tile
    multiples, then blocks O into tn-wide lane-dense slabs:
    (O//tn, d, Inpad, tn).  Done ONCE at model init, not per forward call.
    param_dtype=bf16 is the fast path (half HBM bytes, native MXU).
    """
    O, D, In = allweight.shape
    Opad0 = _round_up(O, 128)
    tn = 256 if Opad0 >= 256 else 128        # 256-wide MXU on v6e/v7x
    Opad = _round_up(O, tn)
    Inpad = _round_up(In, 128)

    w = jnp.transpose(allweight, (1, 2, 0))                     # (d, In, O)
    w = jnp.pad(w, ((0, 0), (0, Inpad - In), (0, Opad - O)))    # (d, Inpad, Opad)
    w = w.reshape(D, Inpad, Opad // tn, tn)
    w = jnp.transpose(w, (2, 0, 1, 3))                          # (njo, d, Inpad, tn)
    if param_dtype is not None:
        w = w.astype(param_dtype)
    d0p = jnp.pad(d0, ((0, 0), (0, Opad - O))).astype(jnp.float32)

    meta = dict(input_size=In, output_size=O, d=D,
                Inpad=Inpad, Opad=Opad, tn=tn)
    return w, d0p, meta


def taylor_forward(x, w_pad, d0_pad, meta, *,
                   force_stream_weights=False, max_tin=None):
    """x: (..., input_size) -> (B, output_size) float32."""
    In, O, D = meta["input_size"], meta["output_size"], meta["d"]
    Inpad, Opad, tn = meta["Inpad"], meta["Opad"], meta["tn"]
    njo = Opad // tn
    itemsize = jnp.dtype(w_pad.dtype).itemsize

    # VMEM budget — generation aware when possible, conservative (v7x) fallback.
    try:
        vmem_cap = int(pltpu.get_tpu_info().vmem_capacity_bytes)
    except Exception:
        vmem_cap = 64 << 20
    budget = int(vmem_cap * 0.6)

    x2 = x.reshape(-1, In)                   # mirrors x.view(-1, input_size)
    B = x2.shape[0]
    row_align = 16 if itemsize < 4 else 8    # bf16 packs 2 rows per sublane

    # Batch tile: as large as B / VMEM allows (AI on weight stream ~ tm FLOPs/B).
    if B < 128:
        tm = _round_up(max(B, 1), row_align)
    else:
        tm = 128
        per_row = 2 * Inpad * itemsize + 2 * tn * 4 + 3 * tn * 4
        for cand in (512, 256, 128):
            if cand <= _round_up(B, 128) and cand * per_row + (8 << 20) <= budget:
                tm = cand
                break
    Bpad = _round_up(B, tm)

    # In chunk: whole padded In when reasonable, else large 128-aligned chunks.
    tin = Inpad
    if max_tin is not None:
        tin = min(tin, _round_up(max_tin, 128))
    while tin > 128 and (Inpad % tin != 0 or tin > 2048):
        tin -= 128
    n_l = Inpad // tin

    # Weight residency decision + explicit VMEM limit.
    w_bytes = int(w_pad.size) * itemsize
    x_blk = tm * Inpad * itemsize
    fixed = (2 * x_blk + 2 * tn * 4 + 2 * tm * tn * 4
             + (3 if n_l > 1 else 2) * tm * tn * 4)
    resident_need = fixed + 2 * w_bytes
    stream_need = fixed + 2 * tin * tn * itemsize
    w_resident = (not force_stream_weights) and \
        (resident_need + (4 << 20) <= budget)
    need = resident_need if w_resident else stream_need
    vmem_limit = int(min(max(need + (8 << 20), 32 << 20), int(vmem_cap * 0.85)))

    # Zero-pad batch rows / In columns (zeros contribute nothing to the dots)
    # and match the weight compute dtype (bf16 fast path).
    xp = jnp.pad(x2, ((0, Bpad - B), (0, Inpad - In))).astype(w_pad.dtype)

    if w_resident:
        # Whole padded weight tensor resident in VMEM: one DMA total.
        w_spec = pl.BlockSpec((njo, D, Inpad, tn), lambda i, j, k, l: (0, 0, 0, 0))
    else:
        # Stream (tin, tn) slabs under auto double-buffering.
        w_spec = pl.BlockSpec((1, 1, tin, tn), lambda i, j, k, l: (j, k, l, 0))

    in_specs = [
        pl.BlockSpec((tm, Inpad), lambda i, j, k, l: (i, 0)),   # resident x slab
        w_spec,
        pl.BlockSpec((1, tn), lambda i, j, k, l: (0, j)),       # d0 tile
    ]
    out_spec = pl.BlockSpec((tm, tn), lambda i, j, k, l: (i, j))

    scratch = [pltpu.VMEM((tm, tn), jnp.float32),   # acc  (sum of cumprods)
               pltpu.VMEM((tm, tn), jnp.float32)]   # prod (running cumprod)
    if n_l > 1:
        scratch.append(pltpu.VMEM((tm, tn), jnp.float32))  # s_k partial reduction

    kernel = functools.partial(_taylor_kernel, tin=tin, n_l=n_l,
                               w_resident=w_resident)

    out = pl.pallas_call(
        kernel,
        out_shape=jax.ShapeDtypeStruct((Bpad, Opad), jnp.float32),
        grid_spec=pltpu.PrefetchScalarGridSpec(
            num_scalar_prefetch=0,
            grid=(Bpad // tm, njo, D, n_l),
            in_specs=in_specs,
            out_specs=out_spec,
            scratch_shapes=scratch,
        ),
        compiler_params=pltpu.CompilerParams(
            dimension_semantics=("parallel", "parallel",
                                 "arbitrary", "arbitrary"),
            vmem_limit_bytes=vmem_limit,
        ),
    )(xp, w_pad, d0_pad)

    return out[:B, :O]


def _kaiming_uniform(key, shape, fan_in, a=math.sqrt(5)):
    gain = math.sqrt(2.0 / (1.0 + a * a))
    bound = gain * math.sqrt(3.0 / fan_in)
    return jax.random.uniform(key, shape, jnp.float32, -bound, bound)


def _reference(x, allweight, d0, compute_dtype):
    # Pure-JAX reference mirroring the PyTorch forward, with inputs quantized
    # to the kernel's compute dtype and f32 accumulation (same as the kernel).
    xb = x.astype(compute_dtype)
    wb = allweight.astype(compute_dtype)
    s = jnp.einsum('bi,oki->bok', xb, wb,
                   preferred_element_type=jnp.float32)   # (B, O, d)
    p = jnp.cumprod(s, axis=2)                            # cumprod over d
    return d0.astype(jnp.float32) + p.sum(axis=2)         # (B, O)


if __name__ == "__main__":
    key = jax.random.PRNGKey(0)

    def run_case(B, input_size, output_size, d, case_key, *, max_tin=None):
        kx, kd0, kw = jax.random.split(case_key, 3)
        x = jax.random.normal(kx, (B, input_size), jnp.float32)
        # d0: (1, O); allweight: (O, d, In)
        d0 = _kaiming_uniform(kd0, (1, output_size), fan_in=output_size)
        allweight = _kaiming_uniform(kw, (output_size, d, input_size),
                                     fan_in=d * input_size)

        # Init-time prep (transpose/pad/bf16-cast happens once, not per call).
        w_pad, d0_pad, meta = prepare_taylor_params(
            allweight, d0, param_dtype=jnp.bfloat16)

        ref = _reference(x, allweight, d0, jnp.bfloat16)

        out_res = jax.block_until_ready(
            taylor_forward(x, w_pad, d0_pad, meta, max_tin=max_tin))
        out_str = jax.block_until_ready(
            taylor_forward(x, w_pad, d0_pad, meta, max_tin=max_tin,
                           force_stream_weights=True))

        assert out_res.shape == (B, output_size)
        assert jnp.allclose(out_res, ref, atol=2e-4, rtol=2e-4), \
            "resident-W path mismatch vs reference"
        assert jnp.allclose(out_str, ref, atol=2e-4, rtol=2e-4), \
            "streamed-W path mismatch vs reference"

    k1, k2 = jax.random.split(key)
    # Small shapes consistent with the module (single-In-chunk fast path).
    run_case(2, 32, 16, 3, k1)
    # Larger In/O to exercise the chunked-In (nl > 1) and multi-O-tile paths.
    run_case(4, 300, 300, 4, k2, max_tin=128)

    print("KERNEL_OK")
</pallas_src>

<mosaic_0001>
module attributes {stable_mosaic.version = 11 : i64} {
  func.func @_taylor_kernel(%arg0: i32, %arg1: i32, %arg2: i32, %arg3: i32, %arg4: memref<16x128xbf16, #tpu.memory_space<vmem>>, %arg5: memref<1x3x128x128xbf16, #tpu.memory_space<vmem>>, %arg6: memref<1x128xf32, #tpu.memory_space<vmem>>, %arg7: memref<16x128xf32, #tpu.memory_space<vmem>>, %arg8: memref<16x128xf32, #tpu.memory_space<vmem>>, %arg9: memref<16x128xf32, #tpu.memory_space<vmem>>) attributes {dimension_semantics = [#tpu.dimension_semantics<parallel>, #tpu.dimension_semantics<parallel>, #tpu.dimension_semantics<arbitrary>, #tpu.dimension_semantics<arbitrary>], iteration_bounds = array<i64: 1, 1, 3, 1>, scalar_prefetch = 0 : i64, scratch_operands = 2 : i64, tpu.core_type = #tpu.core_type<tc>, window_params = [{transform_indices = @transform_0, window_bounds = array<i64: 16, 128>}, {pipeline_mode = #tpu.pipeline_mode<synchronous>, transform_indices = @transform_1, window_bounds = array<i64: 1, 3, 128, 128>}, {transform_indices = @transform_2, window_bounds = array<i64: 1, 128>}, {transform_indices = @transform_3, window_bounds = array<i64: 16, 128>}]} {
    %c0_i32 = arith.constant 0 : i32
    %0 = arith.cmpi eq, %arg2, %c0_i32 : i32
    %c0_i32_0 = arith.constant 0 : i32
    %1 = arith.cmpi eq, %arg3, %c0_i32_0 : i32
    %2 = arith.andi %0, %1 : i1
    %3 = arith.extui %2 : i1 to i32
    %c0_i32_1 = arith.constant 0 : i32
    %4 = arith.cmpi ne, %3, %c0_i32_1 : i32
    scf.if %4 {
      %cst_17 = arith.constant 0.000000e+00 : f32
      %23 = vector.broadcast %cst_17 : f32 to vector<16x128xf32>
      %c0_18 = arith.constant 0 : index
      %c0_19 = arith.constant 0 : index
      %24 = vector.load %arg8[%c0_18, %c0_19] : memref<16x128xf32, #tpu.memory_space<vmem>>, vector<16x128xf32>
      tpu.vector_store %arg8[%c0_18, %c0_19], %23 {strides = array<i32>} : memref<16x128xf32, #tpu.memory_space<vmem>>, vector<16x128xf32>,
      %cst_20 = arith.constant 1.000000e+00 : f32
      %25 = vector.broadcast %cst_20 : f32 to vector<16x128xf32>
      %c0_21 = arith.constant 0 : index
      %c0_22 = arith.constant 0 : index
      %26 = vector.load %arg9[%c0_21, %c0_22] : memref<16x128xf32, #tpu.memory_space<vmem>>, vector<16x128xf32>
      tpu.vector_store %arg9[%c0_21, %c0_22], %25 {strides = array<i32>} : memref<16x128xf32, #tpu.memory_space<vmem>>, vector<16x128xf32>,
    } else {
    }
    %c0 = arith.constant 0 : index
    %c0_2 = arith.constant 0 : index
    %5 = vector.load %arg4[%c0, %c0_2] : memref<16x128xbf16, #tpu.memory_space<vmem>>, vector<16x128xbf16>
    %6 = arith.index_cast %arg1 : i32 to index
    %7 = arith.index_cast %arg2 : i32 to index
    %c0_3 = arith.constant 0 : index
    %c0_4 = arith.constant 0 : index
    %8 = vector.load %arg5[%6, %7, %c0_3, %c0_4] : memref<1x3x128x128xbf16, #tpu.memory_space<vmem>>, vector<1x1x128x128xbf16>
    %9 = vector.shape_cast %8 : vector<1x1x128x128xbf16> to vector<128x128xbf16>
    %cst = arith.constant dense<0.000000e+00> : vector<16x128xf32>
    %10 = tpu.matmul %5, %9, %cst {dimension_numbers = #tpu.dot_dimension_numbers<[1], [0], [0], [1], [0, 0, 1, 1], [], []>} : vector<16x128xbf16>, vector<128x128xbf16>, vector<16x128xf32> -> vector<16x128xf32>
    %c0_5 = arith.constant 0 : index
    %c0_6 = arith.constant 0 : index
    %11 = vector.load %arg9[%c0_5, %c0_6] : memref<16x128xf32, #tpu.memory_space<vmem>>, vector<16x128xf32>
    %12 = arith.mulf %11, %10 : vector<16x128xf32>
    %c0_7 = arith.constant 0 : index
    %c0_8 = arith.constant 0 : index
    %13 = vector.load %arg9[%c0_7, %c0_8] : memref<16x128xf32, #tpu.memory_space<vmem>>, vector<16x128xf32>
    tpu.vector_store %arg9[%c0_7, %c0_8], %12 {strides = array<i32>} : memref<16x128xf32, #tpu.memory_space<vmem>>, vector<16x128xf32>,
    %c0_9 = arith.constant 0 : index
    %c0_10 = arith.constant 0 : index
    %14 = vector.load %arg8[%c0_9, %c0_10] : memref<16x128xf32, #tpu.memory_space<vmem>>, vector<16x128xf32>
    %c0_11 = arith.constant 0 : index
    %c0_12 = arith.constant 0 : index
    %15 = vector.load %arg9[%c0_11, %c0_12] : memref<16x128xf32, #tpu.memory_space<vmem>>, vector<16x128xf32>
    %16 = arith.addf %14, %15 : vector<16x128xf32>
    %c0_13 = arith.constant 0 : index
    %c0_14 = arith.constant 0 : index
    %17 = vector.load %arg8[%c0_13, %c0_14] : memref<16x128xf32, #tpu.memory_space<vmem>>, vector<16x128xf32>
    tpu.vector_store %arg8[%c0_13, %c0_14], %16 {strides = array<i32>} : memref<16x128xf32, #tpu.memory_space<vmem>>, vector<16x128xf32>,
    %c2_i32 = arith.constant 2 : i32
    %18 = arith.cmpi eq, %arg2, %c2_i32 : i32
    %c0_i32_15 = arith.constant 0 : i32
    %19 = arith.cmpi eq, %arg3, %c0_i32_15 : i32
    %20 = arith.andi %18, %19 : i1
    %21 = arith.extui %20 : i1 to i32
    %c0_i32_16 = arith.constant 0 : i32
    %22 = arith.cmpi ne, %21, %c0_i32_16 : i32
    scf.if %22 {
      %c0_17 = arith.constant 0 : index
      %c0_18 = arith.constant 0 : index
      %23 = vector.load %arg8[%c0_17, %c0_18] : memref<16x128xf32, #tpu.memory_space<vmem>>, vector<16x128xf32>
      %c0_19 = arith.constant 0 : index
      %c0_20 = arith.constant 0 : index
      %24 = vector.load %arg6[%c0_19, %c0_20] : memref<1x128xf32, #tpu.memory_space<vmem>>, vector<1x128xf32>
      %25 = vector.broadcast %24 : vector<1x128xf32> to vector<16x128xf32>
      %26 = arith.addf %23, %25 : vector<16x128xf32>
      %c0_21 = arith.constant 0 : index
      %c0_22 = arith.constant 0 : index
      %27 = vector.load %arg7[%c0_21, %c0_22] : memref<16x128xf32, #tpu.memory_space<vmem>>, vector<16x128xf32>
      tpu.vector_store %arg7[%c0_21, %c0_22], %26 {strides = array<i32>} : memref<16x128xf32, #tpu.memory_space<vmem>>, vector<16x128xf32>,
    } else {
    }
    return
  }
  func.func @transform_0(%arg0: i32, %arg1: i32, %arg2: i32, %arg3: i32) -> (i32, i32) {
    %c0_i32 = arith.constant 0 : i32
    %c0_i32_0 = arith.constant 0 : i32
    return %arg0, %c0_i32 : i32, i32
  }
  func.func @transform_1(%arg0: i32, %arg1: i32, %arg2: i32, %arg3: i32) -> (i32, i32, i32, i32) {
    %c0_i32 = arith.constant 0 : i32
    %c0_i32_0 = arith.constant 0 : i32
    %c0_i32_1 = arith.constant 0 : i32
    %c0_i32_2 = arith.constant 0 : i32
    %c0_i32_3 = arith.constant 0 : i32
    return %c0_i32, %c0_i32_0, %c0_i32_1, %c0_i32_2 : i32, i32, i32, i32
  }
  func.func @transform_2(%arg0: i32, %arg1: i32, %arg2: i32, %arg3: i32) -> (i32, i32) {
    %c0_i32 = arith.constant 0 : i32
    %c0_i32_0 = arith.constant 0 : i32
    return %c0_i32, %arg1 : i32, i32
  }
  func.func @transform_3(%arg0: i32, %arg1: i32, %arg2: i32, %arg3: i32) -> (i32, i32) {
    %c0_i32 = arith.constant 0 : i32
    return %arg0, %arg1 : i32, i32
  }
}

</mosaic_0001>

<llo_original>
// kernel: tpu_custom_call.1
$region0: #{tpu_custom_call.1}
  #allocation0 [shape = 'u32[]', space=smem, size = 0x4, offset = 0x4, fixed_abs, tag = 'smem constant byte address 0x4 - core index']
  #allocation1 [shape = 'u32[144,128]{1,0:T(1,128)}', space=vmem, size = 0x12000, scoped, tag = 'internal scratch']
  #allocation2 [shape = 'f32[16,128]{1,0:T(8,128)}', space=vmem, size = 0x2000, scoped, tag = 'scratch operand']
  #allocation3 [shape = 'f32[16,128]{1,0:T(8,128)}', space=vmem, size = 0x2000, scoped, tag = 'scratch operand']
  %s0 = inlined_call_operand.hbm [shape: bf16[16,128], index: 0, kind: input, shape index: {}]
  %s1 = inlined_call_operand.hbm [shape: bf16[1,3,128,128], index: 1, kind: input, shape index: {}]
  %s2 = inlined_call_operand.vmem [shape: f32[1,128], index: 2, kind: input, shape index: {}]
  %s3 = inlined_call_operand.hbm [shape: f32[16,128], index: 3, kind: output, shape index: {}]
  %s4 = sld [smem:[#allocation0]]
  $region61: #{tpu_custom_call.1} parent=0
    _
  %s6 = ssub.s32 1, %s4
  %s7 = scalar_select 0, %s6, %s4
  $region1: #{tpu_custom_call.1} parent=0
    #allocation4 [shape = 'u8[4096]{0}', space=vmem, size = 0x1000, scoped, tag = 'input window, operand 0, single buffered']
    #allocation5 [shape = 's32[2]{0}', space=sflag, size = 0x8, scoped, tag = 'scoped memory for tpu_custom_call.1']
    #allocation6 [shape = 's32[2]{0}', space=sflag, size = 0x8, scoped, tag = 'scoped memory for tpu_custom_call.1']
    #allocation7 [shape = 'u8[98304]{0}', space=vmem, size = 0x18000, scoped, tag = 'input window, operand 1, single buffered']
    #allocation8 [shape = 's32[1]{0}', space=sflag, size = 0x4, scoped, tag = 'scoped memory for tpu_custom_call.1']
    #allocation9 [shape = 'u8[8192]{0}', space=vmem, size = 0x2000, scoped, tag = 'output window, operand 0, single buffered']
    %8 = vsyncpa [#allocation5], 0
    %9 = vsyncpa [#allocation8], 0
    %10 = vsyncpa [#allocation6], 0
    loop: start=0, step=1, limit=5
    $region2: #{tpu_custom_call.1} parent=1 // loop_pre_header
      _
    $region3: #{tpu_custom_call.1} parent=1 // loop_header
      %s12 = sphi 0, %s16
      %p13 = scmp.ge.s32.totalorder %s12, 5
      %s19 = sphi 0, %s45
      %s20 = sphi 0, %s41
      %s21 = sphi 0, %s37
      %s22 = sphi 0, %s33
      %s23 = sphi 0, %s19
      %s24 = sphi 0, %s20
      %s25 = sphi 0, %s21
      %s26 = sphi 0, %s22
      %s27 = sphi 0, %s23
      %s28 = sphi 0, %s24
      %s29 = sphi 0, %s25
      %s30 = sphi 0, %s26
      %s48 = sphi 0, %s50
      %s51 = sphi 0, %s48
      %s52 = sphi 0, %s51
      %s68 = sphi 0, %s52
      %s72 = sphi 0, %s72
      %s74 = sphi 0, %s72
      %s75 = sphi 0, %s74
      %s89 = sphi 0, %s75
      %s95 = sphi 0, %s97
      %s98 = sphi 0, %s95
      %s99 = sphi 0, %s98
      %s115 = sphi 0, %s99
      %s123 = sphi 0, %s125
      %s126 = sphi 0, %s123
      %s127 = sphi 0, %s126
      %s143 = sphi 0, %s127
    $region4: #{tpu_custom_call.1} parent=1 // loop_header_branch
      %15 = sbr.rel (%p13) target = $region8
    $region5: #{tpu_custom_call.1} parent=1 // loop_body
      %s17 = ssub.s32 %s12, 1
      %s18 = ssub.s32 %s12, 2
      %s31 = sadd.s32 1, %s22
      %p32 = scmp.ge.s32.totalorder %s31, 1
      %s33 = scalar_select %p32, 0, %s31
      %s34 = sadd.s32 1, %s21
      %s35 = scalar_select %p32, %s34, %s21
      %p36 = scmp.ge.s32.totalorder %s35, 3
      %s37 = scalar_select %p36, 0, %s35
      %s38 = sadd.s32 1, %s20
      %s39 = scalar_select %p36, %s38, %s20
      %p40 = scmp.ge.s32.totalorder %s39, 1
      %s41 = scalar_select %p40, 0, %s39
      %s42 = sadd.s32 1, %s19
      %s43 = scalar_select %p40, %s42, %s19
      %p44 = scmp.ge.s32.totalorder %s43, 1
      %s45 = scalar_select %p44, 0, %s43
      %s46 = ssub.s32 %s19, %s45
      %p47 = scmp.eq.s32.totalorder %s46, 0
      %s49 = sadd.s32 %s48, 1
      %s50 = scalar_select %p47, %s48, %s49
      %p53 = pneg %p47
      %p54 = scmp.eq.s32.totalorder %s12, 2
      %p55 = por %p53, %p54
      %p56 = scmp.ne.s32.totalorder %s48, %s51
      %p57 = scmp.eq.s32.totalorder %s12, 0
      %p58 = por %p56, %p57
      %p59 = scmp.ne.s32.totalorder %s48, %s51
      %p60 = scmp.eq.s32.totalorder %s17, 2
      %p61 = por %p59, %p60
      %p62 = scmp.ne.s32.totalorder %s51, %s52
      %p63 = scmp.eq.s32.totalorder %s17, 0
      %p64 = por %p62, %p63
      %p65 = scmp.ne.s32.totalorder %s51, %s52
      %p66 = scmp.eq.s32.totalorder %s18, 2
      %p67 = por %p65, %p66
      %p69 = scmp.ne.s32.totalorder %s52, %s68
      %p70 = scmp.eq.s32.totalorder %s18, 0
      %p71 = por %p69, %p70
      %s73 = sadd.s32 %s72, 1
      %p76 = scmp.eq.s32.totalorder %s12, 2
      %p77 = scmp.ne.s32.totalorder %s72, %s74
      %p78 = scmp.eq.s32.totalorder %s12, 0
      %p79 = por %p77, %p78
      %p80 = scmp.ne.s32.totalorder %s72, %s74
      %p81 = scmp.eq.s32.totalorder %s17, 2
      %p82 = por %p80, %p81
      %p83 = scmp.ne.s32.totalorder %s74, %s75
      %p84 = scmp.eq.s32.totalorder %s17, 0
      %p85 = por %p83, %p84
      %p86 = scmp.ne.s32.totalorder %s74, %s75
      %p87 = scmp.eq.s32.totalorder %s18, 2
      %p88 = por %p86, %p87
      %p90 = scmp.ne.s32.totalorder %s75, %s89
      %p91 = scmp.eq.s32.totalorder %s18, 0
      %p92 = por %p90, %p91
      %s93 = ssub.s32 %s20, %s41
      %p94 = scmp.eq.s32.totalorder %s93, 0
      %s96 = sadd.s32 %s95, 1
      %s97 = scalar_select %p94, %s95, %s96
      %p100 = pneg %p94
      %p101 = scmp.eq.s32.totalorder %s12, 2
      %p102 = por %p100, %p101
      %p103 = scmp.ne.s32.totalorder %s95, %s98
      %p104 = scmp.eq.s32.totalorder %s12, 0
      %p105 = por %p103, %p104
      %p106 = scmp.ne.s32.totalorder %s95, %s98
      %p107 = scmp.eq.s32.totalorder %s17, 2
      %p108 = por %p106, %p107
      %p109 = scmp.ne.s32.totalorder %s98, %s99
      %p110 = scmp.eq.s32.totalorder %s17, 0
      %p111 = por %p109, %p110
      %p112 = scmp.ne.s32.totalorder %s98, %s99
      %p113 = scmp.eq.s32.totalorder %s18, 2
      %p114 = por %p112, %p113
      %p116 = scmp.ne.s32.totalorder %s99, %s115
      %p117 = scmp.eq.s32.totalorder %s18, 0
      %p118 = por %p116, %p117
      %s119 = ssub.s32 %s19, %s45
      %s120 = ssub.s32 %s20, %s41
      %s121 = sor.u32 %s119, %s120
      %p122 = scmp.eq.s32.totalorder %s121, 0
      %s124 = sadd.s32 %s123, 1
      %s125 = scalar_select %p122, %s123, %s124
      %p128 = pneg %p122
      %p129 = scmp.eq.s32.totalorder %s12, 2
      %p130 = por %p128, %p129
      %p131 = scmp.ne.s32.totalorder %s123, %s126
      %p132 = scmp.eq.s32.totalorder %s12, 0
      %p133 = por %p131, %p132
      %p134 = scmp.ne.s32.totalorder %s123, %s126
      %p135 = scmp.eq.s32.totalorder %s17, 2
      %p136 = por %p134, %p135
      %p137 = scmp.ne.s32.totalorder %s126, %s127
      %p138 = scmp.eq.s32.totalorder %s17, 0
      %p139 = por %p137, %p138
      %p140 = scmp.ne.s32.totalorder %s126, %s127
      %p141 = scmp.eq.s32.totalorder %s18, 2
      %p142 = por %p140, %p141
      %p144 = scmp.ne.s32.totalorder %s127, %s143
      %p145 = scmp.eq.s32.totalorder %s18, 0
      %p146 = por %p144, %p145
      %p147 = scmp.le.s32.totalorder 1, %s12
      %p148 = scmp.lt.s32.totalorder %s12, 4
      %p149 = pnand %p147, %p148
      %p150 = pneg %p149
      // Predicated region
      $region9: #{tpu_custom_call.1} parent=5 // pred_check
        _
      $region10: #{tpu_custom_call.1} parent=5 // pred_check_branch
        %152 = sbr.rel (%p149) target = $region12
      $region11: #{tpu_custom_call.1} parent=5 // pred_region
        %s153 = ssub.s32 %s12, 1
        // Predicated region
        $region13: #{tpu_custom_call.1} parent=11 // pred_check
          %p154 = pneg %p64
        $region14: #{tpu_custom_call.1} parent=11 // pred_check_branch
          %156 = sbr.rel (%p154) target = $region16
        $region15: #{tpu_custom_call.1} parent=11 // pred_region
          %s157 = smul.u32 2, %s23
          %s159 = ssub.s32 128, 128
          %160 = vsyncadd [#allocation5], %s159
          %s161 = smul.addr %s157, 64
          %s162 = scalar_lea.hbm %s0, %s161
          %s163 = sshll.u32 [#allocation4], 4
          %s164 = int_to_ptr.vmem [resolvable:$true] %s163
          %169 = dma.hbm_to_vmem [thread:$0]  %s162, 128, %s164, [#allocation5], 64, 64, 4
        $region16: #{tpu_custom_call.1} parent=11 // pred_fallthru
          _
        // Predicated region
        $region17: #{tpu_custom_call.1} parent=11 // pred_check
          %p170 = pneg %p85
        $region18: #{tpu_custom_call.1} parent=11 // pred_check_branch
          %172 = sbr.rel (%p170) target = $region20
        $region19: #{tpu_custom_call.1} parent=11 // pred_region
          %s174 = ssub.s32 3072, 3072
          %175 = vsyncadd [#allocation8], %s174
          %s176 = sshll.u32 [#allocation7], 4
          %s177 = int_to_ptr.vmem [resolvable:$true] %s176
          %182 = dma.hbm_to_vmem [thread:$0]  %s1, 3072, %s177, [#allocation8], 64, 64, 4
        $region20: #{tpu_custom_call.1} parent=11 // pred_fallthru
          _
        // Predicated region
        $region21: #{tpu_custom_call.1} parent=11 // pred_check
          %p183 = pneg %p111
        $region22: #{tpu_custom_call.1} parent=11 // pred_check_branch
          %185 = sbr.rel (%p183) target = $region24
        $region23: #{tpu_custom_call.1} parent=11 // pred_region
          %p186 = scmp.lt.s32.totalorder %s24, 0
          %s187 = scalar_select %p186, %s24, 0
          %s188 = scalar_lea.vmem %s2, %s187
        $region24: #{tpu_custom_call.1} parent=11 // pred_fallthru
          _
      $region12: #{tpu_custom_call.1} parent=5 // pred_fallthru
        _
      %p189 = scmp.lt.s32.totalorder %s12, 3
      // Predicated region
      $region25: #{tpu_custom_call.1} parent=5 // pred_check
        %p190 = pneg %p189
      $region26: #{tpu_custom_call.1} parent=5 // pred_check_branch
        %192 = sbr.rel (%p190) target = $region28
      $region27: #{tpu_custom_call.1} parent=5 // pred_region
        _
      $region28: #{tpu_custom_call.1} parent=5 // pred_fallthru
        _
      %p193 = scmp.le.s32.totalorder 1, %s12
      %p194 = scmp.lt.s32.totalorder %s12, 4
      %p195 = pnand %p193, %p194
      %p196 = pneg %p195
      // Predicated region
      $region29: #{tpu_custom_call.1} parent=5 // pred_check
        _
      $region30: #{tpu_custom_call.1} parent=5 // pred_check_branch
        %198 = sbr.rel (%p195) target = $region32
      $region31: #{tpu_custom_call.1} parent=5 // pred_region
        %s199 = ssub.s32 %s12, 1
        // Predicated region
        $region33: #{tpu_custom_call.1} parent=31 // pred_check
          %p200 = pneg %p64
        $region34: #{tpu_custom_call.1} parent=31 // pred_check_branch
          %202 = sbr.rel (%p200) target = $region36
        $region35: #{tpu_custom_call.1} parent=31 // pred_region
          %203 = dma.done [#allocation5], 128
        $region36: #{tpu_custom_call.1} parent=31 // pred_fallthru
          _
        // Predicated region
        $region37: #{tpu_custom_call.1} parent=31 // pred_check
          %p204 = pneg %p85
        $region38: #{tpu_custom_call.1} parent=31 // pred_check_branch
          %206 = sbr.rel (%p204) target = $region40
        $region39: #{tpu_custom_call.1} parent=31 // pred_region
          %207 = dma.done [#allocation8], 3072
        $region40: #{tpu_custom_call.1} parent=31 // pred_fallthru
          _
        %p208 = pneg %p64
        %p209 = pneg %p61
        %p210 = pneg %p85
        %p211 = pneg %p82
        %p212 = scmp.lt.s32.totalorder %s24, 0
        %s213 = scalar_select %p212, %s24, 0
        %s214 = scalar_lea.vmem %s2, %s213
        %p215 = pneg %p111
        %p216 = pneg %p108
        %p217 = pneg %p139
        %p218 = pneg %p136
        %s219 = smul.u32 2, %s23
        %p220 = scmp.lt.s32.totalorder %s24, 0
        %s221 = scalar_select %p220, %s24, 0
        %s222 = scalar_lea.vmem %s2, %s221
        %s223 = smul.u32 2, %s23
        %p225 = scmp.eq.s32.totalorder %s25, 0
        %p226 = scmp.eq.s32.totalorder %s26, 0
        %p227 = pnand %p225, %p226
        %p228 = pneg %p227
        // Predicated region
        $region41: #{tpu_custom_call.1} parent=31 // pred_check
          _
        $region42: #{tpu_custom_call.1} parent=31 // pred_check_branch
          %230 = sbr.rel (%p227) target = $region44
        $region43: #{tpu_custom_call.1} parent=31 // pred_region
          %231 = vst [vmem:[#allocation2] sm:$0xff] 0.0
          %232 = vst [vmem:[#allocation2 + $0x8] sm:$0xff] 0.0
          %233 = vst [vmem:[#allocation3] sm:$0xff] 1.0
          %234 = vst [vmem:[#allocation3 + $0x8] sm:$0xff] 1.0
        $region44: #{tpu_custom_call.1} parent=31 // pred_fallthru
          _
        %v235 = vld [vmem:[#allocation4] sm:$0xf]
        %v236 = vld [vmem:[#allocation4 + $0x4] sm:$0xf]
        %s237 = smul.u32 %s25, 16
        %s238 = smul.u32 %s24, 48
        %s239 = sadd.s32 %s237, %s238
        %s240 = smul.addr %s239, 4
        %s241 = scalar_lea.vmem [#allocation7], %s240
        %v242 = vld [vmem:[%s241] sm:$0xf]
        %v243 = vld [vmem:[%s241 + $0x4] sm:$0xf]
        %v244 = vld [vmem:[%s241 + $0x8] sm:$0xf]
        %v245 = vld [vmem:[%s241 + $0xc] sm:$0xf]
        %v246 = vld [vmem:[%s241 + $0x10] sm:$0xf]
        %v247 = vld [vmem:[%s241 + $0x14] sm:$0xf]
        %v248 = vld [vmem:[%s241 + $0x18] sm:$0xf]
        %v249 = vld [vmem:[%s241 + $0x1c] sm:$0xf]
        %v250 = vld [vmem:[%s241 + $0x20] sm:$0xf]
        %v251 = vld [vmem:[%s241 + $0x24] sm:$0xf]
        %v252 = vld [vmem:[%s241 + $0x28] sm:$0xf]
        %v253 = vld [vmem:[%s241 + $0x2c] sm:$0xf]
        %v254 = vld [vmem:[%s241 + $0x30] sm:$0xf]
        %v255 = vld [vmem:[%s241 + $0x34] sm:$0xf]
        %v256 = vld [vmem:[%s241 + $0x38] sm:$0xf]
        %v257 = vld [vmem:[%s241 + $0x3c] sm:$0xf]
        %v260 = vunpack.c.l.b16 %v235
        %v261 = vunpack.c.l.b16 %v236
        %v262 = vpack.c.b16 %v261, %v260
        %v280 = vunpack.c.l.b16 %v242
        %v281 = vunpack.c.l.b16 %v243
        %v282 = vunpack.c.l.b16 %v244
        %v283 = vunpack.c.l.b16 %v245
        %v284 = vunpack.c.l.b16 %v246
        %v285 = vunpack.c.l.b16 %v247
        %v286 = vunpack.c.l.b16 %v248
        %v287 = vunpack.c.l.b16 %v249
        %v288 = vunpack.c.l.b16 %v250
        %v289 = vunpack.c.l.b16 %v251
        %v290 = vunpack.c.l.b16 %v252
        %v291 = vunpack.c.l.b16 %v253
        %v292 = vunpack.c.l.b16 %v254
        %v293 = vunpack.c.l.b16 %v255
        %v294 = vunpack.c.l.b16 %v256
        %v295 = vunpack.c.l.b16 %v257
        %v296 = vpack.c.b16 %v281, %v280
        %v297 = vpack.c.b16 %v283, %v282
        %v298 = vpack.c.b16 %v285, %v284
        %v299 = vpack.c.b16 %v287, %v286
        %v300 = vpack.c.b16 %v289, %v288
        %v301 = vpack.c.b16 %v291, %v290
        %v302 = vpack.c.b16 %v293, %v292
        %v303 = vpack.c.b16 %v295, %v294
        %312 = vmatprep.subr.bf16.mxu0 0
        %313 = vmatpush1.bf16.msra.mxu0 %v303
        %314 = vmatprep.subr.bf16.mxu0 0
        %315 = vmatpush1.bf16.msra.mxu0 %v302
        %316 = vmatprep.subr.bf16.mxu0 0
        %317 = vmatpush1.bf16.msra.mxu0 %v301
        %318 = vmatprep.subr.bf16.mxu0 0
        %319 = vmatpush1.bf16.msra.mxu0 %v300
        %320 = vmatprep.subr.bf16.mxu0 0
        %321 = vmatpush1.bf16.msra.mxu0 %v299
        %322 = vmatprep.subr.bf16.mxu0 0
        %323 = vmatpush1.bf16.msra.mxu0 %v298
        %324 = vmatprep.subr.bf16.mxu0 0
        %325 = vmatpush1.bf16.msra.mxu0 %v297
        %326 = vmatprep.subr.bf16.mxu0 0
        %327 = vmatpush1.bf16.msra.mxu0 %v296
        %328 = vmatprep.subr.bf16.mxu0 0
        %329 = vmatpush2.bf16.msra.mxu0 0
        %330 = vmatprep.subr.bf16.mxu0 0
        %331 = vmatpush2.bf16.msra.mxu0 0
        %332 = vmatprep.subr.bf16.mxu0 0
        %333 = vmatpush2.bf16.msra.mxu0 0
        %334 = vmatprep.subr.bf16.mxu0 0
        %335 = vmatpush2.bf16.msra.mxu0 0
        %336 = vmatprep.subr.bf16.mxu0 0
        %337 = vmatpush2.bf16.msra.mxu0 0
        %338 = vmatprep.subr.bf16.mxu0 0
        %339 = vmatpush2.bf16.msra.mxu0 0
        %340 = vmatprep.subr.bf16.mxu0 0
        %341 = vmatpush2.bf16.msra.mxu0 0
        %342 = vmatprep.subr.bf16.mxu0 0
        %343 = vmatpush2.bf16.msra.mxu0 0
        %344 = vmatprep.mubr.bf16.mxu0 0
        %345 = vmatmul.mubr.bf16.gmra.mxu0 %v262
        %v346 = vpop.f32.mrf.mxu0
        %v347 = vadd.f32 0.0, %v346
        %v348 = vpop.f32.mrf.mxu0
        %v349 = vpop.f32.mrf.mxu0
        %v350 = vadd.f32 0.0, %v349
        %v351 = vpop.f32.mrf.mxu0
        %352 = vdwg.mxu0
        %v353 = vld [vmem:[#allocation3] sm:$0xff]
        %v354 = vld [vmem:[#allocation3 + $0x8] sm:$0xff]
        %v355 = vmul.f32 %v353, %v347
        %v356 = vmul.f32 %v354, %v350
        %357 = vst [vmem:[#allocation3] sm:$0xff] %v355
        %358 = vst [vmem:[#allocation3 + $0x8] sm:$0xff] %v356
        %v359 = vld [vmem:[#allocation2] sm:$0xff]
        %v360 = vld [vmem:[#allocation2 + $0x8] sm:$0xff]
        %v361 = vld [vmem:[#allocation3] sm:$0xff]
        %v362 = vld [vmem:[#allocation3 + $0x8] sm:$0xff]
        %v363 = vadd.f32 %v359, %v361
        %v364 = vadd.f32 %v360, %v362
        %365 = vst [vmem:[#allocation2] sm:$0xff] %v363
        %366 = vst [vmem:[#allocation2 + $0x8] sm:$0xff] %v364
        %p367 = scmp.eq.s32.totalorder %s25, 2
        %p368 = pnand %p367, %p226
        %p369 = pneg %p368
        // Predicated region
        $region45: #{tpu_custom_call.1} parent=31 // pred_check
          _
        $region46: #{tpu_custom_call.1} parent=31 // pred_check_branch
          %371 = sbr.rel (%p368) target = $region48
        $region47: #{tpu_custom_call.1} parent=31 // pred_region
          %v372 = vld [vmem:[#allocation2] sm:$0xff]
          %v373 = vld [vmem:[#allocation2 + $0x8] sm:$0xff]
          %v374 = vld [vmem:[%s222] sm:$0x1]
          %v376 = vlaneseq
          %v377 = vshrl.u32 %v376, 7
          %v378 = vsub.s32 0, %v377
          %v379 = vrot.slane %v374, %v378
          %v381 = vadd.f32 %v372, %v379
          %v382 = vadd.f32 %v373, %v379
          %383 = vst [vmem:[#allocation9] sm:$0xff] %v381
          %384 = vst [vmem:[#allocation9 + $0x8] sm:$0xff] %v382
        $region48: #{tpu_custom_call.1} parent=31 // pred_fallthru
          _
        // Predicated region
        $region49: #{tpu_custom_call.1} parent=31 // pred_check
          %p385 = pneg %p136
        $region50: #{tpu_custom_call.1} parent=31 // pred_check_branch
          %387 = sbr.rel (%p385) target = $region52
        $region51: #{tpu_custom_call.1} parent=31 // pred_region
          %s388 = smul.u32 2, %s23
          %s390 = ssub.s32 256, 256
          %391 = vsyncadd [#allocation6], %s390
          %s392 = sadd.s32 %s24, %s388
          %s393 = smul.addr %s392, 128
          %s394 = scalar_lea.hbm %s3, %s393
          %s395 = sshll.u32 [#allocation9], 4
          %s396 = int_to_ptr.vmem [resolvable:$true] %s395
          %401 = dma.vmem_to_hbm [thread:$0]  %s396, 256, %s394, [#allocation6], 128, 128, 8
        $region52: #{tpu_custom_call.1} parent=31 // pred_fallthru
          _
        // Predicated region
        $region53: #{tpu_custom_call.1} parent=31 // pred_check
          %p402 = pneg %p136
        $region54: #{tpu_custom_call.1} parent=31 // pred_check_branch
          %404 = sbr.rel (%p402) target = $region56
        $region55: #{tpu_custom_call.1} parent=31 // pred_region
          %405 = dma.done [#allocation6], 256
        $region56: #{tpu_custom_call.1} parent=31 // pred_fallthru
          _
      $region32: #{tpu_custom_call.1} parent=5 // pred_fallthru
        _
      %p406 = scmp.le.s32.totalorder 2, %s12
      // Predicated region
      $region57: #{tpu_custom_call.1} parent=5 // pred_check
        %p407 = pneg %p406
      $region58: #{tpu_custom_call.1} parent=5 // pred_check_branch
        %409 = sbr.rel (%p407) target = $region60
      $region59: #{tpu_custom_call.1} parent=5 // pred_region
        %s410 = ssub.s32 %s12, 2
      $region60: #{tpu_custom_call.1} parent=5 // pred_fallthru
        _
    $region6: #{tpu_custom_call.1} parent=1 // loop_footer
      %s16 = sadd.s32 1, %s12
    $region7: #{tpu_custom_call.1} parent=1 // loop_footer_branch
      %11 = sbr.rel target = $region3
    $region8: #{tpu_custom_call.1} parent=1 // loop_exit
      _
    %411 = vsyncpa [#allocation5], 1
    %s412 = scalar_lea.sflag [#allocation5], 1
    %413 = vsyncpa %s412, 1
    %414 = vsyncpa [#allocation8], 1
    %415 = vsyncpa [#allocation6], 1
    %s416 = scalar_lea.sflag [#allocation6], 1
    %417 = vsyncpa %s416, 1

</llo_original>
